<compile_context>
chip_gen: v6e
topology: v6e:2x2x1
jax: 0.10.0
libtpu: 0.0.40
codegen_flags: <defaults>
</compile_context>

<pallas_src>
import jax
import jax.numpy as jnp
from jax import lax
from jax.experimental import pallas as pl
from jax.experimental.pallas import tpu as pltpu


def _cdiv(a, b):
    return -(-a // b)


def _round_up(a, b):
    return _cdiv(a, b) * b


def _vmem_capacity_bytes():
    try:
        info = pltpu.get_tpu_info()
        cap = int(getattr(info, "vmem_capacity_bytes", 0))
        if cap > 0:
            return cap
    except Exception:
        pass
    return 128 << 20  # v5e/v6e default; v7x reports 64 MiB when queryable


# --------------------------------------------------------------------------
# Kernel 1: single-slab path — one (Bt, C, N) block per grid step.
# --------------------------------------------------------------------------
def _dmin_slab_kernel(C, N, eps):
    inv_c = 1.0 / C
    # C == 1: unbiased variance is 0/0 -> NaN, matching torch.var(ddof=1).
    inv_cm1 = (1.0 / (C - 1)) if C > 1 else float("nan")
    inv_n = 1.0 / N

    def kernel(x_ref, w_ref, b_ref, blend_ref, o_ref):
        x = x_ref[...].astype(jnp.float32)                  # (Bt, C, N) f32 in-reg

        # Single-pass per-(b, n) instance stats over channels (sublanes).
        s = jnp.sum(x, axis=1, keepdims=True)               # (Bt, 1, N)
        sq = jnp.sum(x * x, axis=1, keepdims=True)          # (Bt, 1, N)
        mean_in = s * inv_c
        var_in = (sq - (mean_in * mean_in) * C) * inv_cm1   # unbiased (ddof=1)
        var_in = jnp.maximum(var_in, 0.0)                   # guard cancellation

        # Per-b layer stats over positions (lanes). Block last dim == logical N,
        # so the lane reduction is exact (no pad lanes).
        mean_ln = jnp.sum(mean_in, axis=2, keepdims=True) * inv_n       # (Bt,1,1)
        temp = var_in + mean_in * mean_in
        var_ln = jnp.sum(temp, axis=2, keepdims=True) * inv_n - mean_ln * mean_ln

        # Softmax-blended stats (softmax hoisted to wrapper; SMEM scalars).
        mean = blend_ref[0] * mean_in + blend_ref[1] * mean_ln          # (Bt,1,N)
        var = blend_ref[2] * var_in + blend_ref[3] * var_ln

        # Fold normalize + affine into a single x*scale + shift pass.
        inv_std = lax.rsqrt(var + eps)                      # EUP, row-sized only
        scale = inv_std * w_ref[...]                        # (Bt,1,N) * (1,N)
        shift = b_ref[...] - mean * scale
        o_ref[...] = (x * scale + shift).astype(o_ref.dtype)

    return kernel


# --------------------------------------------------------------------------
# Kernel 2: N-tiled two-phase path — grid (B, phase, Ntiles).
#   phase 0: accumulate per-b layer-stat sums across N tiles (VMEM scratch).
#   phase 1: recompute instance stats per tile and normalize.
# --------------------------------------------------------------------------
def _dmin_tiled_kernel(C, N, Nt, eps):
    inv_c = 1.0 / C
    inv_cm1 = (1.0 / (C - 1)) if C > 1 else float("nan")
    inv_n = 1.0 / N

    def kernel(x_ref, w_ref, b_ref, blend_ref, o_ref, msum_ref, vsum_ref):
        p = pl.program_id(1)          # 0 = layer-stat accumulation, 1 = normalize
        n = pl.program_id(2)

        x = x_ref[...].astype(jnp.float32)                  # (1, C, Nt)
        s = jnp.sum(x, axis=1, keepdims=True)               # (1, 1, Nt)
        sq = jnp.sum(x * x, axis=1, keepdims=True)
        mean_in = s * inv_c
        var_in = jnp.maximum((sq - (mean_in * mean_in) * C) * inv_cm1, 0.0)
        temp = var_in + mean_in * mean_in                    # (1, 1, Nt)

        @pl.when((p == 0) & (n == 0))
        def _init():
            msum_ref[...] = jnp.zeros_like(msum_ref)
            vsum_ref[...] = jnp.zeros_like(vsum_ref)

        @pl.when(p == 0)
        def _accumulate():
            # Mask lanes beyond the logical N in the ragged last tile.
            lane = lax.broadcasted_iota(jnp.int32, mean_in.shape, 2) + n * Nt
            valid = lane < N
            msum_ref[...] += jnp.sum(jnp.where(valid, mean_in, 0.0),
                                     axis=2, keepdims=True)
            vsum_ref[...] += jnp.sum(jnp.where(valid, temp, 0.0),
                                     axis=2, keepdims=True)

        @pl.when(p == 1)
        def _normalize():
            mean_ln = msum_ref[...] * inv_n                  # (1,1,1)
            var_ln = vsum_ref[...] * inv_n - mean_ln * mean_ln
            mean = blend_ref[0] * mean_in + blend_ref[1] * mean_ln
            var = blend_ref[2] * var_in + blend_ref[3] * var_ln
            inv_std = lax.rsqrt(var + eps)
            scale = inv_std * w_ref[...]                      # (1,1,Nt)*(1,Nt)
            shift = b_ref[...] - mean * scale
            o_ref[...] = (x * scale + shift).astype(o_ref.dtype)

    return kernel


# --------------------------------------------------------------------------
# Wrapper
# --------------------------------------------------------------------------
def dmin_pallas(x, weight, bias, mean_weight, var_weight, eps=1e-5,
                _force_path=None):
    """DMIN forward. x: (B, C, N); weight/bias: (1, N, 1); mean/var_weight: (2,)."""
    B, C, N = x.shape
    w_row = weight.reshape(1, N).astype(jnp.float32)
    b_row = bias.reshape(1, N).astype(jnp.float32)
    # Grid-invariant 2-element softmaxes computed once in the wrapper;
    # the four blend scalars ride in SMEM.
    blend = jnp.concatenate(
        [jax.nn.softmax(mean_weight.astype(jnp.float32)),
         jax.nn.softmax(var_weight.astype(jnp.float32))])    # (4,) f32

    # ---- generation-aware VMEM / block budgets ----
    vmem_cap = _vmem_capacity_bytes()                # 64 MiB v7x, 128 MiB v5e/v6e
    vmem_limit = int(min(max(vmem_cap * 4 // 5, 32 << 20), 112 << 20))
    # in+out double-buffered blocks + f32 elementwise temps ~= 8 block-sized slabs
    block_target = int(min(max((vmem_limit - (2 << 20)) // 8, 1 << 20), 8 << 20))

    row_f32 = C * N * 4          # f32-equivalent footprint of one batch row

    if _force_path is None:
        use_tiled = row_f32 > block_target or (B < 4 and row_f32 > (1 << 20))
    else:
        use_tiled = (_force_path == "tiled")
    use_tiled = use_tiled and N >= 256   # need >= 2 lane tiles of 128 to tile N

    if not use_tiled:
        # ----- single-slab path: one (Bt, C, N) block per grid step -----
        bt_fit = max(1, block_target // max(row_f32, 1))
        bt_target = max(1, B // 4)    # >= 4 grid steps when B allows (v7x: 2 TCs)
        Bt = int(max(1, min(bt_fit, bt_target, B)))
        grid = (_cdiv(B, Bt),)        # partial batch tail is masked by Pallas
        need = 6 * Bt * row_f32 + (4 << 20)
        vmem_lim = int(max(min(max(vmem_limit, need), vmem_cap * 9 // 10), 16 << 20))

        return pl.pallas_call(
            _dmin_slab_kernel(C, N, eps),
            out_shape=jax.ShapeDtypeStruct((B, C, N), x.dtype),
            grid=grid,
            in_specs=[
                pl.BlockSpec((Bt, C, N), lambda i: (i, 0, 0)),       # x slab
                pl.BlockSpec((1, N), lambda i: (0, 0)),              # weight row
                pl.BlockSpec((1, N), lambda i: (0, 0)),              # bias row
                pl.BlockSpec(memory_space=pltpu.MemorySpace.SMEM),   # blend scalars
            ],
            out_specs=pl.BlockSpec((Bt, C, N), lambda i: (i, 0, 0)),
            compiler_params=pltpu.CompilerParams(
                dimension_semantics=("parallel",),
                vmem_limit_bytes=vmem_lim,
            ),
        )(x, w_row, b_row, blend)

    # ----- N-tiled two-phase path (small B / large C*N rows) -----
    Bt = 1
    lanes_fit = max(128, (block_target // (C * 4)) // 128 * 128)
    Nt = int(min(lanes_fit, _round_up(N, 128)))
    if _cdiv(N, Nt) < 2 and N > 128:
        Nt = int(max(128, _round_up(_cdiv(N, 2), 128)))  # >= 2 tiles for pipelining
    n_tiles = _cdiv(N, Nt)
    grid = (B, 2, n_tiles)   # (batch, phase: 0=stats / 1=normalize, N tile)

    return pl.pallas_call(
        _dmin_tiled_kernel(C, N, Nt, eps),
        out_shape=jax.ShapeDtypeStruct((B, C, N), x.dtype),
        grid=grid,
        in_specs=[
            pl.BlockSpec((Bt, C, Nt), lambda b, p, n: (b, 0, n)),
            pl.BlockSpec((1, Nt), lambda b, p, n: (0, n)),
            pl.BlockSpec((1, Nt), lambda b, p, n: (0, n)),
            pl.BlockSpec(memory_space=pltpu.MemorySpace.SMEM),
        ],
        # Phase 0 never writes the output; parking its block index on tile 0
        # keeps that block resident so no garbage writeback happens before
        # phase 1 fills it.
        out_specs=pl.BlockSpec((Bt, C, Nt), lambda b, p, n: (b, 0, n * p)),
        scratch_shapes=[
            pltpu.VMEM((Bt, 1, 1), jnp.float32),   # sum_n mean_in
            pltpu.VMEM((Bt, 1, 1), jnp.float32),   # sum_n (var_in + mean_in^2)
        ],
        compiler_params=pltpu.CompilerParams(
            dimension_semantics=("parallel", "arbitrary", "arbitrary"),
            vmem_limit_bytes=int(vmem_limit),
        ),
    )(x, w_row, b_row, blend)


# --------------------------------------------------------------------------
# Pure-JAX reference (transcription of the PyTorch forward)
# --------------------------------------------------------------------------
def dmin_reference(x, weight, bias, mean_weight, var_weight, eps=1e-5):
    xt = jnp.transpose(x, (0, 2, 1))                        # b c n -> b n c
    mean_in = jnp.mean(xt, axis=-1, keepdims=True)
    var_in = jnp.var(xt, axis=-1, keepdims=True, ddof=1)    # torch default unbiased
    mean_ln = jnp.mean(mean_in, axis=1, keepdims=True)
    temp = var_in + mean_in ** 2
    var_ln = jnp.mean(temp, axis=1, keepdims=True) - mean_ln ** 2
    mw = jax.nn.softmax(mean_weight)
    vw = jax.nn.softmax(var_weight)
    mean = mw[0] * mean_in + mw[1] * mean_ln
    var = vw[0] * var_in + vw[1] * var_ln
    xn = (xt - mean) / jnp.sqrt(var + eps)
    xn = xn * weight + bias                                 # weight: (1, N, 1)
    return jnp.transpose(xn, (0, 2, 1))                     # b n c -> b c n


if __name__ == "__main__":
    eps = 1e-5
    key = jax.random.PRNGKey(0)

    def make_inputs(k, B, C, N):
        kx, kw, kb, km, kv = jax.random.split(k, 5)
        x = jax.random.normal(kx, (B, C, N), dtype=jnp.float32)
        weight = 1.0 + 0.1 * jax.random.normal(kw, (1, N, 1), dtype=jnp.float32)
        bias = 0.1 * jax.random.normal(kb, (1, N, 1), dtype=jnp.float32)
        mean_weight = jnp.ones((2,), jnp.float32) + 0.5 * jax.random.normal(km, (2,), dtype=jnp.float32)
        var_weight = jnp.ones((2,), jnp.float32) + 0.5 * jax.random.normal(kv, (2,), dtype=jnp.float32)
        return x, weight, bias, mean_weight, var_weight

    k1, k2 = jax.random.split(key)

    # Path 1: single-slab batch-tiled kernel; ragged N (40) and a partial
    # batch tail block (B=9, Bt=2 -> 5 grid steps, last masked).
    x, w, b, mw, vw = make_inputs(k1, 9, 16, 40)
    out = jax.block_until_ready(dmin_pallas(x, w, b, mw, vw, eps))
    ref = dmin_reference(x, w, b, mw, vw, eps)
    if not bool(jnp.allclose(out, ref, atol=1e-4, rtol=1e-4)):
        raise AssertionError("Pallas DMIN (slab path) mismatch vs reference")

    # Path 2: N-tiled two-phase kernel (forced); ragged last N tile (N=300,
    # Nt=256 -> 2 tiles, 44 valid lanes in the second).
    x, w, b, mw, vw = make_inputs(k2, 2, 8, 300)
    out = jax.block_until_ready(
        dmin_pallas(x, w, b, mw, vw, eps, _force_path="tiled"))
    ref = dmin_reference(x, w, b, mw, vw, eps)
    if not bool(jnp.allclose(out, ref, atol=1e-4, rtol=1e-4)):
        raise AssertionError("Pallas DMIN (tiled path) mismatch vs reference")

    print("KERNEL_OK")
</pallas_src>

<mosaic_0001>
module attributes {stable_mosaic.version = 11 : i64} {
  func.func @kernel(%arg0: i32, %arg1: memref<2x16x40xf32, #tpu.memory_space<vmem>>, %arg2: memref<1x40xf32, #tpu.memory_space<vmem>>, %arg3: memref<1x40xf32, #tpu.memory_space<vmem>>, %arg4: memref<4xf32, #tpu.memory_space<smem>>, %arg5: memref<2x16x40xf32, #tpu.memory_space<vmem>>) attributes {dimension_semantics = [#tpu.dimension_semantics<parallel>], iteration_bounds = array<i64: 5>, scalar_prefetch = 0 : i64, scratch_operands = 0 : i64, tpu.core_type = #tpu.core_type<tc>, window_params = [{transform_indices = @transform_0, window_bounds = array<i64: 2, 16, 40>}, {pipeline_mode = #tpu.pipeline_mode<synchronous>, transform_indices = @transform_1, window_bounds = array<i64: 1, 40>}, {pipeline_mode = #tpu.pipeline_mode<synchronous>, transform_indices = @transform_2, window_bounds = array<i64: 1, 40>}, {transform_indices = @transform_3, window_bounds = array<i64: 4>}, {transform_indices = @transform_4, window_bounds = array<i64: 2, 16, 40>}]} {
    %c0 = arith.constant 0 : index
    %c0_0 = arith.constant 0 : index
    %c0_1 = arith.constant 0 : index
    %0 = vector.load %arg1[%c0, %c0_0, %c0_1] : memref<2x16x40xf32, #tpu.memory_space<vmem>>, vector<2x16x40xf32>
    %cst = arith.constant dense<0.000000e+00> : vector<2x40xf32>
    %1 = vector.multi_reduction <add>, %0, %cst [1] : vector<2x16x40xf32> to vector<2x40xf32>
    %2 = vector.shape_cast %1 : vector<2x40xf32> to vector<2x1x40xf32>
    %3 = arith.mulf %0, %0 : vector<2x16x40xf32>
    %cst_2 = arith.constant dense<0.000000e+00> : vector<2x40xf32>
    %4 = vector.multi_reduction <add>, %3, %cst_2 [1] : vector<2x16x40xf32> to vector<2x40xf32>
    %5 = vector.shape_cast %4 : vector<2x40xf32> to vector<2x1x40xf32>
    %cst_3 = arith.constant 6.250000e-02 : f32
    %6 = vector.broadcast %cst_3 : f32 to vector<2x1x40xf32>
    %7 = arith.mulf %2, %6 : vector<2x1x40xf32>
    %8 = arith.mulf %7, %7 : vector<2x1x40xf32>
    %cst_4 = arith.constant 1.600000e+01 : f32
    %9 = vector.broadcast %cst_4 : f32 to vector<2x1x40xf32>
    %10 = arith.mulf %8, %9 : vector<2x1x40xf32>
    %11 = arith.subf %5, %10 : vector<2x1x40xf32>
    %cst_5 = arith.constant 0.0666666701 : f32
    %12 = vector.broadcast %cst_5 : f32 to vector<2x1x40xf32>
    %13 = arith.mulf %11, %12 : vector<2x1x40xf32>
    %cst_6 = arith.constant 0.000000e+00 : f32
    %14 = vector.broadcast %cst_6 : f32 to vector<2x1x40xf32>
    %15 = arith.maximumf %13, %14 : vector<2x1x40xf32>
    %cst_7 = arith.constant dense<0.000000e+00> : vector<2x1xf32>
    %16 = vector.multi_reduction <add>, %7, %cst_7 [2] : vector<2x1x40xf32> to vector<2x1xf32>
    %17 = vector.shape_cast %16 : vector<2x1xf32> to vector<2x1x1xf32>
    %cst_8 = arith.constant 2.500000e-02 : f32
    %18 = vector.broadcast %cst_8 : f32 to vector<2x1x1xf32>
    %19 = arith.mulf %17, %18 : vector<2x1x1xf32>
    %20 = arith.mulf %7, %7 : vector<2x1x40xf32>
    %21 = arith.addf %15, %20 : vector<2x1x40xf32>
    %cst_9 = arith.constant dense<0.000000e+00> : vector<2x1xf32>
    %22 = vector.multi_reduction <add>, %21, %cst_9 [2] : vector<2x1x40xf32> to vector<2x1xf32>
    %23 = vector.shape_cast %22 : vector<2x1xf32> to vector<2x1x1xf32>
    %cst_10 = arith.constant 2.500000e-02 : f32
    %24 = vector.broadcast %cst_10 : f32 to vector<2x1x1xf32>
    %25 = arith.mulf %23, %24 : vector<2x1x1xf32>
    %26 = arith.mulf %19, %19 : vector<2x1x1xf32>
    %27 = arith.subf %25, %26 : vector<2x1x1xf32>
    %c0_11 = arith.constant 0 : index
    %28 = memref.load %arg4[%c0_11] : memref<4xf32, #tpu.memory_space<smem>>
    %29 = vector.broadcast %28 : f32 to vector<2x1x40xf32>
    %30 = arith.mulf %29, %7 : vector<2x1x40xf32>
    %c1 = arith.constant 1 : index
    %31 = memref.load %arg4[%c1] : memref<4xf32, #tpu.memory_space<smem>>
    %32 = vector.broadcast %31 : f32 to vector<2x1x1xf32>
    %33 = arith.mulf %32, %19 : vector<2x1x1xf32>
    %34 = vector.broadcast %33 : vector<2x1x1xf32> to vector<2x1x40xf32>
    %35 = arith.addf %30, %34 : vector<2x1x40xf32>
    %c2 = arith.constant 2 : index
    %36 = memref.load %arg4[%c2] : memref<4xf32, #tpu.memory_space<smem>>
    %37 = vector.broadcast %36 : f32 to vector<2x1x40xf32>
    %38 = arith.mulf %37, %15 : vector<2x1x40xf32>
    %c3 = arith.constant 3 : index
    %39 = memref.load %arg4[%c3] : memref<4xf32, #tpu.memory_space<smem>>
    %40 = vector.broadcast %39 : f32 to vector<2x1x1xf32>
    %41 = arith.mulf %40, %27 : vector<2x1x1xf32>
    %42 = vector.broadcast %41 : vector<2x1x1xf32> to vector<2x1x40xf32>
    %43 = arith.addf %38, %42 : vector<2x1x40xf32>
    %cst_12 = arith.constant 9.99999974E-6 : f32
    %44 = vector.broadcast %cst_12 : f32 to vector<2x1x40xf32>
    %45 = arith.addf %43, %44 : vector<2x1x40xf32>
    %46 = math.rsqrt %45 : vector<2x1x40xf32>
    %c0_13 = arith.constant 0 : index
    %c0_14 = arith.constant 0 : index
    %47 = vector.load %arg2[%c0_13, %c0_14] : memref<1x40xf32, #tpu.memory_space<vmem>>, vector<1x40xf32>
    %48 = vector.shape_cast %47 : vector<1x40xf32> to vector<1x1x40xf32>
    %49 = vector.broadcast %48 : vector<1x1x40xf32> to vector<2x1x40xf32>
    %50 = arith.mulf %46, %49 : vector<2x1x40xf32>
    %c0_15 = arith.constant 0 : index
    %c0_16 = arith.constant 0 : index
    %51 = vector.load %arg3[%c0_15, %c0_16] : memref<1x40xf32, #tpu.memory_space<vmem>>, vector<1x40xf32>
    %52 = arith.mulf %35, %50 : vector<2x1x40xf32>
    %53 = vector.shape_cast %51 : vector<1x40xf32> to vector<1x1x40xf32>
    %54 = vector.broadcast %53 : vector<1x1x40xf32> to vector<2x1x40xf32>
    %55 = arith.subf %54, %52 : vector<2x1x40xf32>
    %56 = vector.broadcast %50 : vector<2x1x40xf32> to vector<2x16x40xf32>
    %57 = arith.mulf %0, %56 : vector<2x16x40xf32>
    %58 = vector.broadcast %55 : vector<2x1x40xf32> to vector<2x16x40xf32>
    %59 = arith.addf %57, %58 : vector<2x16x40xf32>
    %c0_17 = arith.constant 0 : index
    %c0_18 = arith.constant 0 : index
    %c0_19 = arith.constant 0 : index
    %60 = vector.load %arg5[%c0_17, %c0_18, %c0_19] : memref<2x16x40xf32, #tpu.memory_space<vmem>>, vector<2x16x40xf32>
    tpu.vector_store %arg5[%c0_17, %c0_18, %c0_19], %59 {strides = array<i32>} : memref<2x16x40xf32, #tpu.memory_space<vmem>>, vector<2x16x40xf32>,
    return
  }
  func.func @transform_0(%arg0: i32) -> (i32, i32, i32) {
    %c0_i32 = arith.constant 0 : i32
    %c0_i32_0 = arith.constant 0 : i32
    %c0_i32_1 = arith.constant 0 : i32
    return %arg0, %c0_i32, %c0_i32_0 : i32, i32, i32
  }
  func.func @transform_1(%arg0: i32) -> (i32, i32) {
    %c0_i32 = arith.constant 0 : i32
    %c0_i32_0 = arith.constant 0 : i32
    %c0_i32_1 = arith.constant 0 : i32
    return %c0_i32, %c0_i32_0 : i32, i32
  }
  func.func @transform_2(%arg0: i32) -> (i32, i32) {
    %c0_i32 = arith.constant 0 : i32
    %c0_i32_0 = arith.constant 0 : i32
    %c0_i32_1 = arith.constant 0 : i32
    return %c0_i32, %c0_i32_0 : i32, i32
  }
  func.func @transform_3(%arg0: i32) -> i32 {
    %c0_i32 = arith.constant 0 : i32
    %c0_i32_0 = arith.constant 0 : i32
    return %c0_i32 : i32
  }
  func.func @transform_4(%arg0: i32) -> (i32, i32, i32) {
    %c0_i32 = arith.constant 0 : i32
    %c0_i32_0 = arith.constant 0 : i32
    %c0_i32_1 = arith.constant 0 : i32
    return %arg0, %c0_i32, %c0_i32_0 : i32, i32, i32
  }
}

</mosaic_0001>

<llo_original>
// kernel: tpu_custom_call.1
$region0: #{tpu_custom_call.1}
  #allocation0 [shape = 'u32[]', space=smem, size = 0x4, offset = 0x4, fixed_abs, tag = 'smem constant byte address 0x4 - core index']
  #allocation1 [shape = 'u32[144,128]{1,0:T(1,128)}', space=vmem, size = 0x12000, scoped, tag = 'internal scratch']
  %s0 = inlined_call_operand.hbm [shape: f32[9,16,40], index: 0, kind: input, shape index: {}]
  %s1 = inlined_call_operand.vmem [shape: f32[1,40], index: 1, kind: input, shape index: {}]
  %s2 = inlined_call_operand.vmem [shape: f32[1,40], index: 2, kind: input, shape index: {}]
  %s3 = inlined_call_operand.vmem [shape: f32[4], index: 3, kind: input, shape index: {}]
  %s4 = inlined_call_operand.hbm [shape: f32[9,16,40], index: 4, kind: output, shape index: {}]
  %s5 = sld [smem:[#allocation0]]
  $region57: #{tpu_custom_call.1} parent=0
    _
  %s7 = ssub.s32 1, %s5
  %s8 = scalar_select 0, %s7, %s5
  $region1: #{tpu_custom_call.1} parent=0
    #allocation2 [shape = 'u8[32768]{0}', space=vmem, size = 0x8000, scoped, tag = 'input window, operand 0']
    #allocation3 [shape = 's32[2]{0}', space=sflag, size = 0x8, scoped, tag = 'scoped memory for tpu_custom_call.1']
    #allocation4 [shape = 's32[2]{0}', space=sflag, size = 0x8, scoped, tag = 'scoped memory for tpu_custom_call.1']
    #allocation5 [shape = 's32[2]{0}', space=sflag, size = 0x8, scoped, tag = 'scoped memory for tpu_custom_call.1']
    #allocation6 [shape = 'u8[512]{0}', space=smem, size = 0x200, scoped, tag = 'input window, operand 3, single buffered']
    #allocation7 [shape = 'u8[32768]{0}', space=vmem, size = 0x8000, scoped, tag = 'output window, operand 0']
    %9 = vsyncpa [#allocation3], 0
    %s10 = scalar_lea.sflag [#allocation3], 1
    %11 = vsyncpa %s10, 0
    %12 = vsyncpa [#allocation5], 0
    %13 = vsyncpa [#allocation4], 0
    %s14 = scalar_lea.sflag [#allocation4], 1
    %15 = vsyncpa %s14, 0
    loop: start=0, step=1, limit=7
    $region2: #{tpu_custom_call.1} parent=1 // loop_pre_header
      _
    $region3: #{tpu_custom_call.1} parent=1 // loop_header
      %s17 = sphi 0, %s21
      %p18 = scmp.ge.s32.totalorder %s17, 7
      %s27 = sphi 0, %s29
      %s30 = sphi 0, %s27
      %s31 = sphi 0, %s30
      %s47 = sphi 0, %s31
      %s51 = sphi 0, %s51
      %s53 = sphi 0, %s51
      %s54 = sphi 0, %s53
      %s68 = sphi 0, %s54
      %s72 = sphi 0, %s72
      %s74 = sphi 0, %s72
      %s75 = sphi 0, %s74
      %s89 = sphi 0, %s75
      %s93 = sphi 0, %s93
      %s95 = sphi 0, %s93
      %s96 = sphi 0, %s95
      %s110 = sphi 0, %s96
      %s116 = sphi 0, %s118
      %s119 = sphi 0, %s116
      %s120 = sphi 0, %s119
      %s136 = sphi 0, %s120
    $region4: #{tpu_custom_call.1} parent=1 // loop_header_branch
      %20 = sbr.rel (%p18) target = $region8
    $region5: #{tpu_custom_call.1} parent=1 // loop_body
      %s22 = ssub.s32 %s17, 1
      %s23 = ssub.s32 %s17, 2
      %s24 = sadd.s32 %s17, 1
      %s25 = ssub.s32 %s17, %s24
      %p26 = scmp.eq.s32.totalorder %s25, 0
      %s28 = sadd.s32 %s27, 1
      %s29 = scalar_select %p26, %s27, %s28
      %p32 = pneg %p26
      %p33 = scmp.eq.s32.totalorder %s17, 4
      %p34 = por %p32, %p33
      %p35 = scmp.ne.s32.totalorder %s27, %s30
      %p36 = scmp.eq.s32.totalorder %s17, 0
      %p37 = por %p35, %p36
      %p38 = scmp.ne.s32.totalorder %s27, %s30
      %p39 = scmp.eq.s32.totalorder %s22, 4
      %p40 = por %p38, %p39
      %p41 = scmp.ne.s32.totalorder %s30, %s31
      %p42 = scmp.eq.s32.totalorder %s22, 0
      %p43 = por %p41, %p42
      %p44 = scmp.ne.s32.totalorder %s30, %s31
      %p45 = scmp.eq.s32.totalorder %s23, 4
      %p46 = por %p44, %p45
      %p48 = scmp.ne.s32.totalorder %s31, %s47
      %p49 = scmp.eq.s32.totalorder %s23, 0
      %p50 = por %p48, %p49
      %s52 = sadd.s32 %s51, 1
      %p55 = scmp.eq.s32.totalorder %s17, 4
      %p56 = scmp.ne.s32.totalorder %s51, %s53
      %p57 = scmp.eq.s32.totalorder %s17, 0
      %p58 = por %p56, %p57
      %p59 = scmp.ne.s32.totalorder %s51, %s53
      %p60 = scmp.eq.s32.totalorder %s22, 4
      %p61 = por %p59, %p60
      %p62 = scmp.ne.s32.totalorder %s53, %s54
      %p63 = scmp.eq.s32.totalorder %s22, 0
      %p64 = por %p62, %p63
      %p65 = scmp.ne.s32.totalorder %s53, %s54
      %p66 = scmp.eq.s32.totalorder %s23, 4
      %p67 = por %p65, %p66
      %p69 = scmp.ne.s32.totalorder %s54, %s68
      %p70 = scmp.eq.s32.totalorder %s23, 0
      %p71 = por %p69, %p70
      %s73 = sadd.s32 %s72, 1
      %p76 = scmp.eq.s32.totalorder %s17, 4
      %p77 = scmp.ne.s32.totalorder %s72, %s74
      %p78 = scmp.eq.s32.totalorder %s17, 0
      %p79 = por %p77, %p78
      %p80 = scmp.ne.s32.totalorder %s72, %s74
      %p81 = scmp.eq.s32.totalorder %s22, 4
      %p82 = por %p80, %p81
      %p83 = scmp.ne.s32.totalorder %s74, %s75
      %p84 = scmp.eq.s32.totalorder %s22, 0
      %p85 = por %p83, %p84
      %p86 = scmp.ne.s32.totalorder %s74, %s75
      %p87 = scmp.eq.s32.totalorder %s23, 4
      %p88 = por %p86, %p87
      %p90 = scmp.ne.s32.totalorder %s75, %s89
      %p91 = scmp.eq.s32.totalorder %s23, 0
      %p92 = por %p90, %p91
      %s94 = sadd.s32 %s93, 1
      %p97 = scmp.eq.s32.totalorder %s17, 4
      %p98 = scmp.ne.s32.totalorder %s93, %s95
      %p99 = scmp.eq.s32.totalorder %s17, 0
      %p100 = por %p98, %p99
      %p101 = scmp.ne.s32.totalorder %s93, %s95
      %p102 = scmp.eq.s32.totalorder %s22, 4
      %p103 = por %p101, %p102
      %p104 = scmp.ne.s32.totalorder %s95, %s96
      %p105 = scmp.eq.s32.totalorder %s22, 0
      %p106 = por %p104, %p105
      %p107 = scmp.ne.s32.totalorder %s95, %s96
      %p108 = scmp.eq.s32.totalorder %s23, 4
      %p109 = por %p107, %p108
      %p111 = scmp.ne.s32.totalorder %s96, %s110
      %p112 = scmp.eq.s32.totalorder %s23, 0
      %p113 = por %p111, %p112
      %s114 = ssub.s32 %s17, %s24
      %p115 = scmp.eq.s32.totalorder %s114, 0
      %s117 = sadd.s32 %s116, 1
      %s118 = scalar_select %p115, %s116, %s117
      %p121 = pneg %p115
      %p122 = scmp.eq.s32.totalorder %s17, 4
      %p123 = por %p121, %p122
      %p124 = scmp.ne.s32.totalorder %s116, %s119
      %p125 = scmp.eq.s32.totalorder %s17, 0
      %p126 = por %p124, %p125
      %p127 = scmp.ne.s32.totalorder %s116, %s119
      %p128 = scmp.eq.s32.totalorder %s22, 4
      %p129 = por %p127, %p128
      %p130 = scmp.ne.s32.totalorder %s119, %s120
      %p131 = scmp.eq.s32.totalorder %s22, 0
      %p132 = por %p130, %p131
      %p133 = scmp.ne.s32.totalorder %s119, %s120
      %p134 = scmp.eq.s32.totalorder %s23, 4
      %p135 = por %p133, %p134
      %p137 = scmp.ne.s32.totalorder %s120, %s136
      %p138 = scmp.eq.s32.totalorder %s23, 0
      %p139 = por %p137, %p138
      %p140 = scmp.le.s32.totalorder 1, %s17
      %p141 = scmp.lt.s32.totalorder %s17, 6
      %p142 = pnand %p140, %p141
      %p143 = pneg %p142
      // Predicated region
      $region9: #{tpu_custom_call.1} parent=5 // pred_check
        _
      $region10: #{tpu_custom_call.1} parent=5 // pred_check_branch
        %145 = sbr.rel (%p142) target = $region12
      $region11: #{tpu_custom_call.1} parent=5 // pred_region
        %s146 = ssub.s32 %s17, 1
        // Predicated region
        $region13: #{tpu_custom_call.1} parent=11 // pred_check
          %p147 = pneg %p64
        $region14: #{tpu_custom_call.1} parent=11 // pred_check_branch
          %149 = sbr.rel (%p147) target = $region16
        $region15: #{tpu_custom_call.1} parent=11 // pred_region
          _
        $region16: #{tpu_custom_call.1} parent=11 // pred_fallthru
          _
        // Predicated region
        $region17: #{tpu_custom_call.1} parent=11 // pred_check
          %p150 = pneg %p85
        $region18: #{tpu_custom_call.1} parent=11 // pred_check_branch
          %152 = sbr.rel (%p150) target = $region20
        $region19: #{tpu_custom_call.1} parent=11 // pred_region
          _
        $region20: #{tpu_custom_call.1} parent=11 // pred_fallthru
          _
        // Predicated region
        $region21: #{tpu_custom_call.1} parent=11 // pred_check
          %p153 = pneg %p106
        $region22: #{tpu_custom_call.1} parent=11 // pred_check_branch
          %155 = sbr.rel (%p153) target = $region24
        $region23: #{tpu_custom_call.1} parent=11 // pred_region
          %s157 = ssub.s32 16, 16
          %158 = vsyncadd [#allocation5], %s157
          %s160 = sshll.u32 %s3, 4
          %s161 = int_to_ptr.vmem [resolvable:$true] %s160
          %163 = dma.vmem_to_smem %s161, 16, [#allocation6], [#allocation5]
        $region24: #{tpu_custom_call.1} parent=11 // pred_fallthru
          _
      $region12: #{tpu_custom_call.1} parent=5 // pred_fallthru
        _
      %p164 = scmp.lt.s32.totalorder %s17, 5
      // Predicated region
      $region25: #{tpu_custom_call.1} parent=5 // pred_check
        %p165 = pneg %p164
      $region26: #{tpu_custom_call.1} parent=5 // pred_check_branch
        %167 = sbr.rel (%p165) target = $region28
      $region27: #{tpu_custom_call.1} parent=5 // pred_region
        // Predicated region
        $region29: #{tpu_custom_call.1} parent=27 // pred_check
          %p168 = pneg %p37
        $region30: #{tpu_custom_call.1} parent=27 // pred_check_branch
          %170 = sbr.rel (%p168) target = $region32
        $region31: #{tpu_custom_call.1} parent=27 // pred_region
          %s171 = sand.u32 %s27, 1
          %s172 = scalar_lea.sflag [#allocation3], %s171
          %s173 = sand.u32 %s27, 1
          %s174 = smul.addr %s173, 32
          %s175 = scalar_lea.vmem [#allocation2], %s174
          %s176 = smul.u32 2, %s17
          %s177 = ssub.s32 9, %s176
          %p178 = scmp.lt.s32.totalorder %s177, 2
          %s179 = scalar_select %p178, %s177, 2
          %s180 = smul.u32 128, %s179
          %s181 = smul.u32 %s180, 2
          %s183 = ssub.s32 512, %s181
          %184 = vsyncadd %s172, %s183
          %p185 = scmp.ne.s32.totalorder 0, %s181
          %s186 = smul.addr %s176, 2
          %s187 = smul.addr %s186, 128
          %s188 = scalar_lea.hbm %s0, %s187
          %s189 = smul.u32 %s179, 2
          %s190 = smul.u32 8, %s189
          %s191 = sshll.u32 %s175, 4
          %s192 = int_to_ptr.vmem [resolvable:$true] %s191
          %s193 = sshll.u32 %s190, 4
          %197 = dma.hbm_to_vmem [thread:$0]  (%p185), %s188, %s193, %s192, %s172, 128, 128, 8
        $region32: #{tpu_custom_call.1} parent=27 // pred_fallthru
          _
      $region28: #{tpu_custom_call.1} parent=5 // pred_fallthru
        _
      %p198 = scmp.le.s32.totalorder 1, %s17
      %p199 = scmp.lt.s32.totalorder %s17, 6
      %p200 = pnand %p198, %p199
      %p201 = pneg %p200
      // Predicated region
      $region33: #{tpu_custom_call.1} parent=5 // pred_check
        _
      $region34: #{tpu_custom_call.1} parent=5 // pred_check_branch
        %203 = sbr.rel (%p200) target = $region36
      $region35: #{tpu_custom_call.1} parent=5 // pred_region
        %s204 = ssub.s32 %s17, 1
        %s205 = sand.u32 %s30, 1
        %s206 = scalar_lea.sflag [#allocation3], %s205
        %s207 = sand.u32 %s30, 1
        %s208 = smul.addr %s207, 32
        %s209 = scalar_lea.vmem [#allocation2], %s208
        // Predicated region
        $region37: #{tpu_custom_call.1} parent=35 // pred_check
          %p210 = pneg %p43
        $region38: #{tpu_custom_call.1} parent=35 // pred_check_branch
          %212 = sbr.rel (%p210) target = $region40
        $region39: #{tpu_custom_call.1} parent=35 // pred_region
          %213 = dma.done %s206, 512
        $region40: #{tpu_custom_call.1} parent=35 // pred_fallthru
          _
        // Predicated region
        $region41: #{tpu_custom_call.1} parent=35 // pred_check
          %p214 = pneg %p106
        $region42: #{tpu_custom_call.1} parent=35 // pred_check_branch
          %216 = sbr.rel (%p214) target = $region44
        $region43: #{tpu_custom_call.1} parent=35 // pred_region
          %217 = dma.done [#allocation5], 16
        $region44: #{tpu_custom_call.1} parent=35 // pred_fallthru
          _
        %218 = sfence
        %s219 = sand.u32 %s30, 1
        %s220 = scalar_lea.sflag [#allocation3], %s219
        %s221 = sand.u32 %s30, 1
        %s222 = smul.addr %s221, 32
        %s223 = scalar_lea.vmem [#allocation2], %s222
        %p224 = pneg %p43
        %p225 = pneg %p40
        %p226 = pneg %p64
        %p227 = pneg %p61
        %p228 = pneg %p85
        %p229 = pneg %p82
        %p230 = pneg %p106
        %p231 = pneg %p103
        %p232 = pneg %p132
        %p233 = pneg %p129
        %s234 = sand.u32 %s119, 1
        %s235 = scalar_lea.sflag [#allocation4], %s234
        %s236 = sand.u32 %s119, 1
        %s237 = smul.addr %s236, 32
        %s238 = scalar_lea.vmem [#allocation7], %s237
        %s239 = smul.u32 2, %s22
        %s240 = ssub.s32 9, %s239
        %p241 = scmp.lt.s32.totalorder %s240, 2
        %s242 = scalar_select %p241, %s240, 2
        %s243 = smul.u32 128, %s242
        %s244 = smul.u32 %s243, 2
        %s245 = smul.u32 2, %s22
        %s246 = ssub.s32 9, %s245
        %p247 = scmp.lt.s32.totalorder %s246, 2
        %s248 = scalar_select %p247, %s246, 2
        %s249 = smul.u32 128, %s248
        %s250 = smul.u32 %s249, 2
        %v251 = vld [vmem:[%s209] sm:$0xff]
        %v252 = vld [vmem:[%s209 + $0x8] sm:$0xff]
        %v253 = vld [vmem:[%s209 + $0x10] sm:$0xff]
        %v254 = vld [vmem:[%s209 + $0x18] sm:$0xff]
        %vm255 = vcmask 326656
        %v256 = vsel %vm255, %v251, 0.0
        %v257 = vsel %vm255, %v252, 0.0
        %v258 = vadd.f32 %v256, %v257
        %v259 = vrot.slane %v258, 4
        %v260 = vadd.f32 %v258, %v259
        %v261 = vrot.slane %v260, 2
        %v262 = vadd.f32 %v260, %v261
        %v263 = vrot.slane %v262, 1
        %v264 = vadd.f32 %v262, %v263
        %v265 = vsel %vm255, %v253, 0.0
        %v266 = vsel %vm255, %v254, 0.0
        %v267 = vadd.f32 %v265, %v266
        %v268 = vrot.slane %v267, 4
        %v269 = vadd.f32 %v267, %v268
        %v270 = vrot.slane %v269, 2
        %v271 = vadd.f32 %v269, %v270
        %v272 = vrot.slane %v271, 1
        %v273 = vadd.f32 %v271, %v272
        %v274 = vmul.f32 %v251, %v251
        %v275 = vmul.f32 %v252, %v252
        %v276 = vmul.f32 %v253, %v253
        %v277 = vmul.f32 %v254, %v254
        %v278 = vsel %vm255, %v274, 0.0
        %v279 = vsel %vm255, %v275, 0.0
        %v280 = vadd.f32 %v278, %v279
        %v281 = vrot.slane %v280, 4
        %v282 = vadd.f32 %v280, %v281
        %v283 = vrot.slane %v282, 2
        %v284 = vadd.f32 %v282, %v283
        %v285 = vrot.slane %v284, 1
        %v286 = vadd.f32 %v284, %v285
        %v287 = vsel %vm255, %v276, 0.0
        %v288 = vsel %vm255, %v277, 0.0
        %v289 = vadd.f32 %v287, %v288
        %v290 = vrot.slane %v289, 4
        %v291 = vadd.f32 %v289, %v290
        %v292 = vrot.slane %v291, 2
        %v293 = vadd.f32 %v291, %v292
        %v294 = vrot.slane %v293, 1
        %v295 = vadd.f32 %v293, %v294
        %v296 = vmul.f32 %v264, 0.0625
        %v297 = vmul.f32 %v273, 0.0625
        %v298 = vmul.f32 %v296, %v296
        %v299 = vmul.f32 %v297, %v297
        %v300 = vmul.f32 %v298, 16.0
        %v301 = vmul.f32 %v299, 16.0
        %v302 = vsub.f32 %v286, %v300
        %v303 = vsub.f32 %v295, %v301
        %v304 = vmul.f32 %v302, 0.06666667
        %v305 = vmul.f32 %v303, 0.06666667
        %v306 = vmax.f32 %v304, 0.0
        %v307 = vmax.f32 %v305, 0.0
        %v308 = vsel %vm255, %v296, 0.0
        %309 = vadd.xlane.f32.xlu0 %v308
        %v310 = vpop.xlane.xlu0 %309
        %v311 = vsel %vm255, %v297, 0.0
        %312 = vadd.xlane.f32.xlu0 %v311
        %v313 = vpop.xlane.xlu0 %312
        %v314 = vmul.f32 %v310, 0.025
        %v315 = vmul.f32 %v313, 0.025
        %v316 = vadd.f32 %v306, %v298
        %v317 = vadd.f32 %v307, %v299
        %v318 = vsel %vm255, %v316, 0.0
        %319 = vadd.xlane.f32.xlu0 %v318
        %v320 = vpop.xlane.xlu0 %319
        %v321 = vsel %vm255, %v317, 0.0
        %322 = vadd.xlane.f32.xlu0 %v321
        %v323 = vpop.xlane.xlu0 %322
        %v324 = vmul.f32 %v320, 0.025
        %v325 = vmul.f32 %v323, 0.025
        %v326 = vmul.f32 %v314, %v314
        %v327 = vmul.f32 %v315, %v315
        %v328 = vsub.f32 %v324, %v326
        %v329 = vsub.f32 %v325, %v327
        %s330 = sld [smem:[#allocation6]]
        %v331 = vstv %s330
        %v332 = vmul.f32 %v331, %v296
        %v333 = vmul.f32 %v331, %v297
        %s334 = sld [smem:[#allocation6 + $0x1]]
        %v335 = vstv %s334
        %v336 = vmul.f32 %v335, %v314
        %v337 = vmul.f32 %v335, %v315
        %v338 = vadd.f32 %v332, %v336
        %v339 = vadd.f32 %v333, %v337
        %s340 = sld [smem:[#allocation6 + $0x2]]
        %v341 = vstv %s340
        %v342 = vmul.f32 %v341, %v306
        %v343 = vmul.f32 %v341, %v307
        %s344 = sld [smem:[#allocation6 + $0x3]]
        %v345 = vstv %s344
        %v346 = vmul.f32 %v345, %v328
        %v347 = vmul.f32 %v345, %v329
        %v348 = vadd.f32 %v342, %v346
        %v349 = vadd.f32 %v343, %v347
        %v350 = vadd.f32 %v348, 1e-05
        %v351 = vadd.f32 %v349, 1e-05
        %v352 = vrsqrt.pop %v350
        %v353 = vrsqrt.pop %v351
        %v354 = vld [vmem:[%s1] sm:$0x1]
        %v355 = vmul.f32 %v352, %v354
        %v356 = vmul.f32 %v353, %v354
        %v357 = vld [vmem:[%s2] sm:$0x1]
        %v358 = vmul.f32 %v338, %v355
        %v359 = vmul.f32 %v339, %v356
        %v360 = vsub.f32 %v357, %v358
        %v361 = vsub.f32 %v357, %v359
        %v362 = vlaneseq
        %v363 = vshrl.u32 %v362, 7
        %v364 = vsub.s32 0, %v363
        %v365 = vrot.slane %v355, %v364
        %v366 = vlaneseq
        %v367 = vshrl.u32 %v366, 7
        %v368 = vsub.s32 0, %v367
        %v369 = vrot.slane %v356, %v368
        %v370 = vmul.f32 %v251, %v365
        %v371 = vmul.f32 %v252, %v365
        %v372 = vmul.f32 %v253, %v369
        %v373 = vmul.f32 %v254, %v369
        %v376 = vlaneseq
        %v377 = vshrl.u32 %v376, 7
        %v378 = vsub.s32 0, %v377
        %v379 = vrot.slane %v360, %v378
        %v380 = vlaneseq
        %v381 = vshrl.u32 %v380, 7
        %v382 = vsub.s32 0, %v381
        %v383 = vrot.slane %v361, %v382
        %v386 = vadd.f32 %v370, %v379
        %v387 = vadd.f32 %v371, %v379
        %v388 = vadd.f32 %v372, %v383
        %v389 = vadd.f32 %v373, %v383
        %390 = vst.msk [vmem:[%s238] sm:$0xff] %vm255, %v386
        %391 = vst.msk [vmem:[%s238 + $0x8] sm:$0xff] %vm255, %v387
        %392 = vst.msk [vmem:[%s238 + $0x10] sm:$0xff] %vm255, %v388
        %393 = vst.msk [vmem:[%s238 + $0x18] sm:$0xff] %vm255, %v389
        %s394 = sand.u32 %s119, 1
        %s395 = scalar_lea.sflag [#allocation4], %s394
        %s396 = sand.u32 %s119, 1
        %s397 = smul.addr %s396, 32
        %s398 = scalar_lea.vmem [#allocation7], %s397
        // Predicated region
        $region45: #{tpu_custom_call.1} parent=35 // pred_check
          %p399 = pneg %p129
        $region46: #{tpu_custom_call.1} parent=35 // pred_check_branch
          %401 = sbr.rel (%p399) target = $region48
        $region47: #{tpu_custom_call.1} parent=35 // pred_region
          %s402 = smul.u32 2, %s22
          %s403 = ssub.s32 9, %s402
          %p404 = scmp.lt.s32.totalorder %s403, 2
          %s405 = scalar_select %p404, %s403, 2
          %s406 = smul.u32 128, %s405
          %s407 = smul.u32 %s406, 2
          %s409 = ssub.s32 512, %s407
          %410 = vsyncadd %s395, %s409
          %p411 = scmp.ne.s32.totalorder 0, %s407
          %s412 = smul.addr %s402, 2
          %s413 = smul.addr %s412, 128
          %s414 = scalar_lea.hbm %s4, %s413
          %s415 = smul.u32 %s405, 2
          %s416 = smul.u32 8, %s415
          %s417 = sshll.u32 %s398, 4
          %s418 = int_to_ptr.vmem [resolvable:$true] %s417
          %s419 = sshll.u32 %s416, 4
          %423 = dma.vmem_to_hbm [thread:$0]  (%p411), %s418, %s419, %s414, %s395, 128, 128, 8
        $region48: #{tpu_custom_call.1} parent=35 // pred_fallthru
          _
      $region36: #{tpu_custom_call.1} parent=5 // pred_fallthru
        _
      %p424 = scmp.le.s32.totalorder 2, %s17
      // Predicated region
      $region49: #{tpu_custom_call.1} parent=5 // pred_check
        %p425 = pneg %p424
      $region50: #{tpu_custom_call.1} parent=5 // pred_check_branch
        %427 = sbr.rel (%p425) target = $region52
      $region51: #{tpu_custom_call.1} parent=5 // pred_region
        %s428 = ssub.s32 %s17, 2
        // Predicated region
        $region53: #{tpu_custom_call.1} parent=51 // pred_check
          %p429 = pneg %p135
        $region54: #{tpu_custom_call.1} parent=51 // pred_check_branch
          %431 = sbr.rel (%p429) target = $region56
        $region55: #{tpu_custom_call.1} parent=51 // pred_region
          %s432 = sand.u32 %s120, 1
          %s433 = scalar_lea.sflag [#allocation4], %s432
          %s434 = sand.u32 %s120, 1
          %s435 = smul.addr %s434, 32
          %s436 = scalar_lea.vmem [#allocation7], %s435
          %437 = dma.done %s433, 512
        $region56: #{tpu_custom_call.1} parent=51 // pred_fallthru
          _
      $region52: #{tpu_custom_call.1} parent=5 // pred_fallthru
        _
    $region6: #{tpu_custom_call.1} parent=1 // loop_footer
      %s21 = sadd.s32 1, %s17
    $region7: #{tpu_custom_call.1} parent=1 // loop_footer_branch
      %16 = sbr.rel target = $region3
    $region8: #{tpu_custom_call.1} parent=1 // loop_exit
      _
    %438 = vsyncpa [#allocation3], 1
    %s439 = scalar_lea.sflag [#allocation3], 1
    %440 = vsyncpa %s439, 1
    %441 = vsyncpa [#allocation4], 1
    %s442 = scalar_lea.sflag [#allocation4], 1
    %443 = vsyncpa %s442, 1
    %444 = vsyncpa [#allocation5], 1
    %s445 = scalar_lea.sflag [#allocation5], 1
    %446 = vsyncpa %s445, 1

</llo_original>
